<compile_context>
chip_gen: v5e
topology: v5e:2x2
jax: 0.10.0
libtpu: 0.0.40
codegen_flags: <defaults>
</compile_context>

<pallas_src>
import functools

import jax
import jax.numpy as jnp
from jax import lax
from jax.experimental import pallas as pl
from jax.experimental.pallas import tpu as pltpu


HEAD_PAD = 128          # lane-dense fused (mu | sigma | zero-pad) output width
REPARAM_NOISE = 1e-6


def actor_kernel(x_ref, w1_ref, b1_ref, w2_ref, b2_ref, wh_ref, bh_ref,
                 out_ref, *, n_actions):
    x = x_ref[...]

    h1 = jnp.dot(x, w1_ref[...], preferred_element_type=jnp.float32) + b1_ref[...]
    h1 = jnp.maximum(h1, 0.0)

    h2 = jnp.dot(h1, w2_ref[...], preferred_element_type=jnp.float32) + b2_ref[...]
    h2 = jnp.maximum(h2, 0.0)

    # Fused heads: cols [0, n_actions) = mu, [n_actions, 2n) = sigma, rest pad.
    head = jnp.dot(h2, wh_ref[...], preferred_element_type=jnp.float32) + bh_ref[...]

    # Clamp only the sigma columns (VPU select on a lane-index mask).
    lane = lax.broadcasted_iota(jnp.int32, head.shape, 1)
    is_sigma = (lane >= n_actions) & (lane < 2 * n_actions)
    head = jnp.where(is_sigma, jnp.clip(head, REPARAM_NOISE, 1.0), head)

    out_ref[...] = head.astype(out_ref.dtype)


def _round_up(x, m):
    return (x + m - 1) // m * m


def actor_forward(state, params, n_actions):
    """state: (B, input_dims) -> (mu: (B, n_actions), sigma: (B, n_actions))."""
    w1, b1, w2, b2, wh, bh = params
    B, d_in = state.shape
    assert 2 * n_actions <= HEAD_PAD

    # Sublane-align the batch; tile at 128 rows for large batches.
    block_m = _round_up(B, 8) if B <= 128 else 128
    B_pad = _round_up(B, block_m)
    if B_pad != B:
        state = jnp.pad(state, ((0, B_pad - B), (0, 0)))

    grid = (B_pad // block_m,)

    resident = lambda shape: pl.BlockSpec(shape, lambda i: (0, 0))  # stays in VMEM

    out = pl.pallas_call(
        functools.partial(actor_kernel, n_actions=n_actions),
        out_shape=jax.ShapeDtypeStruct((B_pad, HEAD_PAD), jnp.float32),
        grid=grid,
        in_specs=[
            pl.BlockSpec((block_m, d_in), lambda i: (i, 0)),
            resident(w1.shape), resident(b1.shape),
            resident(w2.shape), resident(b2.shape),
            resident(wh.shape), resident(bh.shape),
        ],
        out_specs=pl.BlockSpec((block_m, HEAD_PAD), lambda i: (i, 0)),
        compiler_params=pltpu.CompilerParams(
            dimension_semantics=("parallel",)),
    )(state, w1, b1, w2, b2, wh, bh)

    mu = out[:B, :n_actions]
    sigma = out[:B, n_actions:2 * n_actions]
    return mu, sigma


def init_params(key, input_dims, fc1_dims, fc2_dims, n_actions):
    """Deterministic synthetic init mirroring nn.Linear fan-in uniform init.

    Returns (kernel_params, raw_head_params). The mu/sigma heads are fused and
    lane-padded ONCE here so the forward wrapper issues no extra XLA ops."""
    ks = jax.random.split(key, 8)

    def uinit(k, fan_in, shape):
        bound = 1.0 / jnp.sqrt(float(fan_in))
        return jax.random.uniform(k, shape, jnp.float32, -bound, bound)

    w1 = uinit(ks[0], input_dims, (input_dims, fc1_dims))
    b1 = uinit(ks[1], input_dims, (1, fc1_dims))
    w2 = uinit(ks[2], fc1_dims, (fc1_dims, fc2_dims))
    b2 = uinit(ks[3], fc1_dims, (1, fc2_dims))
    w_mu = uinit(ks[4], fc2_dims, (fc2_dims, n_actions))
    b_mu = uinit(ks[5], fc2_dims, (1, n_actions))
    w_sg = uinit(ks[6], fc2_dims, (fc2_dims, n_actions))
    b_sg = uinit(ks[7], fc2_dims, (1, n_actions))

    wh = jnp.zeros((fc2_dims, HEAD_PAD), jnp.float32)
    wh = wh.at[:, :n_actions].set(w_mu).at[:, n_actions:2 * n_actions].set(w_sg)
    bh = jnp.zeros((1, HEAD_PAD), jnp.float32)
    bh = bh.at[:, :n_actions].set(b_mu).at[:, n_actions:2 * n_actions].set(b_sg)

    return (w1, b1, w2, b2, wh, bh), (w_mu, b_mu, w_sg, b_sg)


if __name__ == "__main__":
    # Small shapes consistent with the module: input_dims=(8,), fc1=32, fc2=32,
    # n_actions=4, batch=4.
    input_dims, fc1_dims, fc2_dims, n_actions, batch = 8, 32, 32, 4, 4

    key = jax.random.PRNGKey(0)
    k_params, k_state = jax.random.split(key, 2)

    params, raw_heads = init_params(k_params, input_dims, fc1_dims, fc2_dims,
                                    n_actions)
    state = jax.random.normal(k_state, (batch, input_dims), jnp.float32)

    mu, sigma = actor_forward(state, params, n_actions)
    mu = jax.block_until_ready(mu)
    sigma = jax.block_until_ready(sigma)

    # Pure-JAX reference of the same forward pass.
    w1, b1, w2, b2, _, _ = params
    w_mu, b_mu, w_sg, b_sg = raw_heads
    h = jnp.maximum(state @ w1 + b1, 0.0)
    h = jnp.maximum(h @ w2 + b2, 0.0)
    mu_ref = h @ w_mu + b_mu
    sg_ref = jnp.clip(h @ w_sg + b_sg, REPARAM_NOISE, 1.0)

    assert mu.shape == (batch, n_actions)
    assert sigma.shape == (batch, n_actions)
    assert jnp.allclose(mu, mu_ref, atol=1e-4, rtol=1e-4), "mu mismatch vs reference"
    assert jnp.allclose(sigma, sg_ref, atol=1e-4, rtol=1e-4), "sigma mismatch vs reference"

    print("KERNEL_OK")
</pallas_src>

<mosaic_0001>
module attributes {stable_mosaic.version = 11 : i64} {
  func.func @actor_kernel(%arg0: i32, %arg1: memref<8x8xf32, #tpu.memory_space<vmem>>, %arg2: memref<8x32xf32, #tpu.memory_space<vmem>>, %arg3: memref<1x32xf32, #tpu.memory_space<vmem>>, %arg4: memref<32x32xf32, #tpu.memory_space<vmem>>, %arg5: memref<1x32xf32, #tpu.memory_space<vmem>>, %arg6: memref<32x128xf32, #tpu.memory_space<vmem>>, %arg7: memref<1x128xf32, #tpu.memory_space<vmem>>, %arg8: memref<8x128xf32, #tpu.memory_space<vmem>>) attributes {dimension_semantics = [#tpu.dimension_semantics<parallel>], iteration_bounds = array<i64: 1>, scalar_prefetch = 0 : i64, scratch_operands = 0 : i64, tpu.core_type = #tpu.core_type<tc>, window_params = [{transform_indices = @transform_0, window_bounds = array<i64: 8, 8>}, {pipeline_mode = #tpu.pipeline_mode<synchronous>, transform_indices = @transform_1, window_bounds = array<i64: 8, 32>}, {pipeline_mode = #tpu.pipeline_mode<synchronous>, transform_indices = @transform_2, window_bounds = array<i64: 1, 32>}, {pipeline_mode = #tpu.pipeline_mode<synchronous>, transform_indices = @transform_3, window_bounds = array<i64: 32, 32>}, {pipeline_mode = #tpu.pipeline_mode<synchronous>, transform_indices = @transform_4, window_bounds = array<i64: 1, 32>}, {pipeline_mode = #tpu.pipeline_mode<synchronous>, transform_indices = @transform_5, window_bounds = array<i64: 32, 128>}, {pipeline_mode = #tpu.pipeline_mode<synchronous>, transform_indices = @transform_6, window_bounds = array<i64: 1, 128>}, {transform_indices = @transform_7, window_bounds = array<i64: 8, 128>}]} {
    %c0 = arith.constant 0 : index
    %c0_0 = arith.constant 0 : index
    %0 = vector.load %arg1[%c0, %c0_0] : memref<8x8xf32, #tpu.memory_space<vmem>>, vector<8x8xf32>
    %c0_1 = arith.constant 0 : index
    %c0_2 = arith.constant 0 : index
    %1 = vector.load %arg2[%c0_1, %c0_2] : memref<8x32xf32, #tpu.memory_space<vmem>>, vector<8x32xf32>
    %cst = arith.constant dense<0.000000e+00> : vector<8x32xf32>
    %2 = tpu.matmul %0, %1, %cst {dimension_numbers = #tpu.dot_dimension_numbers<[1], [0], [0], [1], [0, 0, 1, 1], [], []>} : vector<8x8xf32>, vector<8x32xf32>, vector<8x32xf32> -> vector<8x32xf32>
    %c0_3 = arith.constant 0 : index
    %c0_4 = arith.constant 0 : index
    %3 = vector.load %arg3[%c0_3, %c0_4] : memref<1x32xf32, #tpu.memory_space<vmem>>, vector<1x32xf32>
    %4 = vector.broadcast %3 : vector<1x32xf32> to vector<8x32xf32>
    %5 = arith.addf %2, %4 : vector<8x32xf32>
    %cst_5 = arith.constant 0.000000e+00 : f32
    %6 = vector.broadcast %cst_5 : f32 to vector<8x32xf32>
    %7 = arith.maximumf %5, %6 : vector<8x32xf32>
    %c0_6 = arith.constant 0 : index
    %c0_7 = arith.constant 0 : index
    %8 = vector.load %arg4[%c0_6, %c0_7] : memref<32x32xf32, #tpu.memory_space<vmem>>, vector<32x32xf32>
    %cst_8 = arith.constant dense<0.000000e+00> : vector<8x32xf32>
    %9 = tpu.matmul %7, %8, %cst_8 {dimension_numbers = #tpu.dot_dimension_numbers<[1], [0], [0], [1], [0, 0, 1, 1], [], []>} : vector<8x32xf32>, vector<32x32xf32>, vector<8x32xf32> -> vector<8x32xf32>
    %c0_9 = arith.constant 0 : index
    %c0_10 = arith.constant 0 : index
    %10 = vector.load %arg5[%c0_9, %c0_10] : memref<1x32xf32, #tpu.memory_space<vmem>>, vector<1x32xf32>
    %11 = vector.broadcast %10 : vector<1x32xf32> to vector<8x32xf32>
    %12 = arith.addf %9, %11 : vector<8x32xf32>
    %cst_11 = arith.constant 0.000000e+00 : f32
    %13 = vector.broadcast %cst_11 : f32 to vector<8x32xf32>
    %14 = arith.maximumf %12, %13 : vector<8x32xf32>
    %c0_12 = arith.constant 0 : index
    %c0_13 = arith.constant 0 : index
    %15 = vector.load %arg6[%c0_12, %c0_13] : memref<32x128xf32, #tpu.memory_space<vmem>>, vector<32x128xf32>
    %cst_14 = arith.constant dense<0.000000e+00> : vector<8x128xf32>
    %16 = tpu.matmul %14, %15, %cst_14 {dimension_numbers = #tpu.dot_dimension_numbers<[1], [0], [0], [1], [0, 0, 1, 1], [], []>} : vector<8x32xf32>, vector<32x128xf32>, vector<8x128xf32> -> vector<8x128xf32>
    %c0_15 = arith.constant 0 : index
    %c0_16 = arith.constant 0 : index
    %17 = vector.load %arg7[%c0_15, %c0_16] : memref<1x128xf32, #tpu.memory_space<vmem>>, vector<1x128xf32>
    %18 = vector.broadcast %17 : vector<1x128xf32> to vector<8x128xf32>
    %19 = arith.addf %16, %18 : vector<8x128xf32>
    %20 = tpu.iota {dimensions = array<i32: 1>} : vector<8x128xi32>
    %c4_i32 = arith.constant 4 : i32
    %21 = vector.broadcast %c4_i32 : i32 to vector<8x128xi32>
    %22 = arith.cmpi sge, %20, %21 : vector<8x128xi32>
    %c8_i32 = arith.constant 8 : i32
    %23 = vector.broadcast %c8_i32 : i32 to vector<8x128xi32>
    %24 = arith.cmpi slt, %20, %23 : vector<8x128xi32>
    %25 = arith.andi %22, %24 : vector<8x128xi1>
    %cst_17 = arith.constant 9.99999997E-7 : f32
    %cst_18 = arith.constant 1.000000e+00 : f32
    %26 = vector.broadcast %cst_17 : f32 to vector<8x128xf32>
    %27 = arith.maximumf %26, %19 : vector<8x128xf32>
    %28 = vector.broadcast %cst_18 : f32 to vector<8x128xf32>
    %29 = arith.minimumf %28, %27 : vector<8x128xf32>
    %30 = arith.select %25, %29, %19 : vector<8x128xi1>, vector<8x128xf32>
    %c0_19 = arith.constant 0 : index
    %c0_20 = arith.constant 0 : index
    %31 = vector.load %arg8[%c0_19, %c0_20] : memref<8x128xf32, #tpu.memory_space<vmem>>, vector<8x128xf32>
    tpu.vector_store %arg8[%c0_19, %c0_20], %30 {strides = array<i32>} : memref<8x128xf32, #tpu.memory_space<vmem>>, vector<8x128xf32>,
    return
  }
  func.func @transform_0(%arg0: i32) -> (i32, i32) {
    %c0_i32 = arith.constant 0 : i32
    %c0_i32_0 = arith.constant 0 : i32
    return %arg0, %c0_i32 : i32, i32
  }
  func.func @transform_1(%arg0: i32) -> (i32, i32) {
    %c0_i32 = arith.constant 0 : i32
    %c0_i32_0 = arith.constant 0 : i32
    %c0_i32_1 = arith.constant 0 : i32
    return %c0_i32, %c0_i32_0 : i32, i32
  }
  func.func @transform_2(%arg0: i32) -> (i32, i32) {
    %c0_i32 = arith.constant 0 : i32
    %c0_i32_0 = arith.constant 0 : i32
    %c0_i32_1 = arith.constant 0 : i32
    return %c0_i32, %c0_i32_0 : i32, i32
  }
  func.func @transform_3(%arg0: i32) -> (i32, i32) {
    %c0_i32 = arith.constant 0 : i32
    %c0_i32_0 = arith.constant 0 : i32
    %c0_i32_1 = arith.constant 0 : i32
    return %c0_i32, %c0_i32_0 : i32, i32
  }
  func.func @transform_4(%arg0: i32) -> (i32, i32) {
    %c0_i32 = arith.constant 0 : i32
    %c0_i32_0 = arith.constant 0 : i32
    %c0_i32_1 = arith.constant 0 : i32
    return %c0_i32, %c0_i32_0 : i32, i32
  }
  func.func @transform_5(%arg0: i32) -> (i32, i32) {
    %c0_i32 = arith.constant 0 : i32
    %c0_i32_0 = arith.constant 0 : i32
    %c0_i32_1 = arith.constant 0 : i32
    return %c0_i32, %c0_i32_0 : i32, i32
  }
  func.func @transform_6(%arg0: i32) -> (i32, i32) {
    %c0_i32 = arith.constant 0 : i32
    %c0_i32_0 = arith.constant 0 : i32
    %c0_i32_1 = arith.constant 0 : i32
    return %c0_i32, %c0_i32_0 : i32, i32
  }
  func.func @transform_7(%arg0: i32) -> (i32, i32) {
    %c0_i32 = arith.constant 0 : i32
    %c0_i32_0 = arith.constant 0 : i32
    return %arg0, %c0_i32 : i32, i32
  }
}

</mosaic_0001>

<llo_original>
// kernel: tpu_custom_call.1
$region0: #{tpu_custom_call.1}
  #allocation0 [shape = 'u32[]', space=smem, size = 0x4, offset = 0x4, fixed_abs, tag = 'smem constant byte address 0x4 - core index']
  #allocation1 [shape = 'u32[72,128]{1,0:T(1,128)}', space=vmem, size = 0x9000, scoped, tag = 'internal scratch']
  %s0 = inlined_call_operand.hbm [shape: f32[8,8], index: 0, kind: input, shape index: {}]
  %s1 = inlined_call_operand.hbm [shape: f32[8,32], index: 1, kind: input, shape index: {}]
  %s2 = inlined_call_operand.vmem [shape: f32[1,32], index: 2, kind: input, shape index: {}]
  %s3 = inlined_call_operand.hbm [shape: f32[32,32], index: 3, kind: input, shape index: {}]
  %s4 = inlined_call_operand.vmem [shape: f32[1,32], index: 4, kind: input, shape index: {}]
  %s5 = inlined_call_operand.hbm [shape: f32[32,128], index: 5, kind: input, shape index: {}]
  %s6 = inlined_call_operand.vmem [shape: f32[1,128], index: 6, kind: input, shape index: {}]
  %s7 = inlined_call_operand.hbm [shape: f32[8,128], index: 7, kind: output, shape index: {}]
  %s8 = sld [smem:[#allocation0]]
  $region54: #{tpu_custom_call.1} parent=0
    _
  %s10 = ssub.s32 1, %s8
  %s11 = scalar_select 0, %s10, %s8
  $region1: #{tpu_custom_call.1} parent=0
    #allocation2 [shape = 'u8[4096]{0}', space=vmem, size = 0x1000, scoped, tag = 'input window, operand 0, single buffered']
    #allocation3 [shape = 's32[1]{0}', space=sflag, size = 0x4, scoped, tag = 'scoped memory for tpu_custom_call.1']
    #allocation4 [shape = 's32[1]{0}', space=sflag, size = 0x4, scoped, tag = 'scoped memory for tpu_custom_call.1']
    #allocation5 [shape = 'u8[4096]{0}', space=vmem, size = 0x1000, scoped, tag = 'input window, operand 1, single buffered']
    #allocation6 [shape = 's32[1]{0}', space=sflag, size = 0x4, scoped, tag = 'scoped memory for tpu_custom_call.1']
    #allocation7 [shape = 'u8[16384]{0}', space=vmem, size = 0x4000, scoped, tag = 'input window, operand 3, single buffered']
    #allocation8 [shape = 'u8[16384]{0}', space=vmem, size = 0x4000, scoped, tag = 'input window, operand 5, single buffered']
    #allocation9 [shape = 's32[1]{0}', space=sflag, size = 0x4, scoped, tag = 'scoped memory for tpu_custom_call.1']
    #allocation10 [shape = 'u8[4096]{0}', space=vmem, size = 0x1000, scoped, tag = 'output window, operand 0, single buffered']
    %12 = vsyncpa [#allocation3], 0
    %13 = vsyncpa [#allocation6], 0
    %14 = vsyncpa [#allocation9], 0
    %15 = vsyncpa [#allocation4], 0
    // Predicated region
    $region2: #{tpu_custom_call.1} parent=1 // pred_check
      _
    $region3: #{tpu_custom_call.1} parent=1 // pred_check_branch
      %17 = sbr.rel (0) target = $region5
    $region4: #{tpu_custom_call.1} parent=1 // pred_region
      %19 = vsyncadd [#allocation3], 0
      %s21 = sshll.u32 %s0, 4
      %s22 = int_to_ptr.hbm [resolvable:$true] %s21
      %s23 = sshll.u32 [#allocation2], 4
      %s24 = int_to_ptr.vmem [resolvable:$true] %s23
      %26 = dma.hbm_to_vmem [thread:$0]  %s22, 128, %s24, [#allocation3]
    $region5: #{tpu_custom_call.1} parent=1 // pred_fallthru
      _
    // Predicated region
    $region6: #{tpu_custom_call.1} parent=1 // pred_check
      _
    $region7: #{tpu_custom_call.1} parent=1 // pred_check_branch
      %28 = sbr.rel (0) target = $region9
    $region8: #{tpu_custom_call.1} parent=1 // pred_region
      %30 = vsyncadd [#allocation6], 0
      %s32 = sshll.u32 %s1, 4
      %s33 = int_to_ptr.hbm [resolvable:$true] %s32
      %s34 = sshll.u32 [#allocation5], 4
      %s35 = int_to_ptr.vmem [resolvable:$true] %s34
      %37 = dma.hbm_to_vmem [thread:$0]  %s33, 128, %s35, [#allocation6]
    $region9: #{tpu_custom_call.1} parent=1 // pred_fallthru
      _
    // Predicated region
    $region10: #{tpu_custom_call.1} parent=1 // pred_check
      _
    $region11: #{tpu_custom_call.1} parent=1 // pred_check_branch
      %39 = sbr.rel (0) target = $region13
    $region12: #{tpu_custom_call.1} parent=1 // pred_region
      _
    $region13: #{tpu_custom_call.1} parent=1 // pred_fallthru
      _
    // Predicated region
    $region14: #{tpu_custom_call.1} parent=1 // pred_check
      _
    $region15: #{tpu_custom_call.1} parent=1 // pred_check_branch
      %41 = sbr.rel (0) target = $region17
    $region16: #{tpu_custom_call.1} parent=1 // pred_region
      %43 = vsyncadd [#allocation6], 0
      %s44 = sshll.u32 %s3, 4
      %s45 = int_to_ptr.hbm [resolvable:$true] %s44
      %s46 = sshll.u32 [#allocation7], 4
      %s47 = int_to_ptr.vmem [resolvable:$true] %s46
      %52 = dma.hbm_to_vmem [thread:$0]  %s45, 512, %s47, [#allocation6], 128, 128, 8
    $region17: #{tpu_custom_call.1} parent=1 // pred_fallthru
      _
    // Predicated region
    $region18: #{tpu_custom_call.1} parent=1 // pred_check
      _
    $region19: #{tpu_custom_call.1} parent=1 // pred_check_branch
      %54 = sbr.rel (0) target = $region21
    $region20: #{tpu_custom_call.1} parent=1 // pred_region
      _
    $region21: #{tpu_custom_call.1} parent=1 // pred_fallthru
      _
    // Predicated region
    $region22: #{tpu_custom_call.1} parent=1 // pred_check
      _
    $region23: #{tpu_custom_call.1} parent=1 // pred_check_branch
      %56 = sbr.rel (0) target = $region25
    $region24: #{tpu_custom_call.1} parent=1 // pred_region
      %58 = vsyncadd [#allocation9], 0
      %s59 = sshll.u32 %s5, 4
      %s60 = int_to_ptr.hbm [resolvable:$true] %s59
      %s61 = sshll.u32 [#allocation8], 4
      %s62 = int_to_ptr.vmem [resolvable:$true] %s61
      %67 = dma.hbm_to_vmem [thread:$0]  %s60, 512, %s62, [#allocation9], 128, 128, 8
    $region25: #{tpu_custom_call.1} parent=1 // pred_fallthru
      _
    // Predicated region
    $region26: #{tpu_custom_call.1} parent=1 // pred_check
      _
    $region27: #{tpu_custom_call.1} parent=1 // pred_check_branch
      %69 = sbr.rel (0) target = $region29
    $region28: #{tpu_custom_call.1} parent=1 // pred_region
      _
    $region29: #{tpu_custom_call.1} parent=1 // pred_fallthru
      _
    // Predicated region
    $region30: #{tpu_custom_call.1} parent=1 // pred_check
      _
    $region31: #{tpu_custom_call.1} parent=1 // pred_check_branch
      %71 = sbr.rel (0) target = $region33
    $region32: #{tpu_custom_call.1} parent=1 // pred_region
      %73 = dma.done [#allocation3], 128
    $region33: #{tpu_custom_call.1} parent=1 // pred_fallthru
      _
    // Predicated region
    $region34: #{tpu_custom_call.1} parent=1 // pred_check
      _
    $region35: #{tpu_custom_call.1} parent=1 // pred_check_branch
      %75 = sbr.rel (0) target = $region37
    $region36: #{tpu_custom_call.1} parent=1 // pred_region
      %77 = dma.done [#allocation6], 128
    $region37: #{tpu_custom_call.1} parent=1 // pred_fallthru
      _
    // Predicated region
    $region38: #{tpu_custom_call.1} parent=1 // pred_check
      _
    $region39: #{tpu_custom_call.1} parent=1 // pred_check_branch
      %79 = sbr.rel (0) target = $region41
    $region40: #{tpu_custom_call.1} parent=1 // pred_region
      %81 = dma.done [#allocation6], 512
    $region41: #{tpu_custom_call.1} parent=1 // pred_fallthru
      _
    // Predicated region
    $region42: #{tpu_custom_call.1} parent=1 // pred_check
      _
    $region43: #{tpu_custom_call.1} parent=1 // pred_check_branch
      %83 = sbr.rel (0) target = $region45
    $region44: #{tpu_custom_call.1} parent=1 // pred_region
      %85 = dma.done [#allocation9], 512
    $region45: #{tpu_custom_call.1} parent=1 // pred_fallthru
      _
    %v86 = vld [vmem:[#allocation2] sm:$0xff]
    %v87 = vld [vmem:[#allocation5] sm:$0xff]
    %v88 = vld [vmem:[%s2] sm:$0x1]
    %v90 = vperm.slane %v88, 0
    %vm92 = vcmask 64512
    %v94 = vsel %vm92, %v86, 0
    %96 = vmatpush.msra.mxu0 0.0
    %97 = vmatpush.msra.mxu0 0.0
    %98 = vmatpush.msra.mxu0 0.0
    %99 = vmatpush.msra.mxu0 0.0
    %100 = vmatpush.msra.mxu0 0.0
    %101 = vmatpush.msra.mxu0 0.0
    %102 = vmatpush.msra.mxu0 0.0
    %103 = vmatpush.msra.mxu0 0.0
    %104 = vmatpush.msra.mxu0 0.0
    %105 = vmatpush.msra.mxu0 0.0
    %106 = vmatpush.msra.mxu0 0.0
    %107 = vmatpush.msra.mxu0 0.0
    %108 = vmatpush.msra.mxu0 0.0
    %109 = vmatpush.msra.mxu0 0.0
    %110 = vmatpush.msra.mxu0 0.0
    %111 = vmatpush.msra.mxu0 %v87
    %112 = vmatmul.f32.gmra.mxu0 %v94
    %v113 = vpop.f32.mrf.mxu0
    %v114 = vadd.f32 %v90, %v113
    %115 = vdwg.mxu0
    %v116 = vmax.f32 %v114, 0.0
    %v117 = vld [vmem:[#allocation7] sm:$0xff]
    %v118 = vld [vmem:[#allocation7 + $0x8] sm:$0xff]
    %v119 = vld [vmem:[#allocation7 + $0x10] sm:$0xff]
    %v120 = vld [vmem:[#allocation7 + $0x18] sm:$0xff]
    %v121 = vld [vmem:[%s4] sm:$0x1]
    %v123 = vperm.slane %v121, 0
    %vm125 = vcmask 261120
    %v127 = vsel %vm125, %v116, 0
    %129 = vmatpush.msra.mxu0 0.0
    %130 = vmatpush.msra.mxu0 0.0
    %131 = vmatpush.msra.mxu0 0.0
    %132 = vmatpush.msra.mxu0 0.0
    %133 = vmatpush.msra.mxu0 0.0
    %134 = vmatpush.msra.mxu0 0.0
    %135 = vmatpush.msra.mxu0 0.0
    %136 = vmatpush.msra.mxu0 0.0
    %137 = vmatpush.msra.mxu0 0.0
    %138 = vmatpush.msra.mxu0 0.0
    %139 = vmatpush.msra.mxu0 0.0
    %140 = vmatpush.msra.mxu0 0.0
    %141 = vmatpush.msra.mxu0 %v120
    %142 = vmatpush.msra.mxu0 %v119
    %143 = vmatpush.msra.mxu0 %v118
    %144 = vmatpush.msra.mxu0 %v117
    %145 = vmatmul.f32.gmra.mxu0 %v127
    %v146 = vpop.f32.mrf.mxu0
    %v147 = vadd.f32 %v123, %v146
    %148 = vdwg.mxu0
    %v149 = vmax.f32 %v147, 0.0
    %v150 = vld [vmem:[#allocation8] sm:$0xff]
    %v151 = vld [vmem:[#allocation8 + $0x8] sm:$0xff]
    %v152 = vld [vmem:[#allocation8 + $0x10] sm:$0xff]
    %v153 = vld [vmem:[#allocation8 + $0x18] sm:$0xff]
    %v154 = vld [vmem:[%s6] sm:$0x1]
    %v156 = vperm.slane %v154, 0
    %v159 = vsel %vm125, %v149, 0
    %161 = vmatpush.msra.mxu0 0.0
    %162 = vmatpush.msra.mxu0 0.0
    %163 = vmatpush.msra.mxu0 0.0
    %164 = vmatpush.msra.mxu0 0.0
    %165 = vmatpush.msra.mxu0 0.0
    %166 = vmatpush.msra.mxu0 0.0
    %167 = vmatpush.msra.mxu0 0.0
    %168 = vmatpush.msra.mxu0 0.0
    %169 = vmatpush.msra.mxu0 0.0
    %170 = vmatpush.msra.mxu0 0.0
    %171 = vmatpush.msra.mxu0 0.0
    %172 = vmatpush.msra.mxu0 0.0
    %173 = vmatpush.msra.mxu0 %v153
    %174 = vmatpush.msra.mxu0 %v152
    %175 = vmatpush.msra.mxu0 %v151
    %176 = vmatpush.msra.mxu0 %v150
    %177 = vmatmul.f32.gmra.mxu0 %v159
    %v178 = vpop.f32.mrf.mxu0
    %v179 = vadd.f32 %v156, %v178
    %180 = vdwg.mxu0
    %v181 = vlaneseq
    %v182 = vand.u32 %v181, 127
    %vm183 = vcmp.ge.s32.totalorder %v182, 4
    %vm184 = vcmp.lt.s32.totalorder %v182, 8
    %vm185 = vmand %vm183, %vm184
    %v186 = vmax.f32 %v179, 1e-06
    %v187 = vmin.f32 %v186, 1.0
    %v188 = vsel %vm185, %v187, %v179
    %189 = vst [vmem:[#allocation10] sm:$0xff] %v188
    // Predicated region
    $region46: #{tpu_custom_call.1} parent=1 // pred_check
      _
    $region47: #{tpu_custom_call.1} parent=1 // pred_check_branch
      %191 = sbr.rel (0) target = $region49
    $region48: #{tpu_custom_call.1} parent=1 // pred_region
      %193 = vsyncadd [#allocation4], 0
      %s195 = sshll.u32 [#allocation10], 4
      %s196 = int_to_ptr.vmem [resolvable:$true] %s195
      %s197 = sshll.u32 %s7, 4
      %s198 = int_to_ptr.hbm [resolvable:$true] %s197
      %200 = dma.vmem_to_hbm [thread:$0]  %s196, 128, %s198, [#allocation4]
    $region49: #{tpu_custom_call.1} parent=1 // pred_fallthru
      _
    // Predicated region
    $region50: #{tpu_custom_call.1} parent=1 // pred_check
      _
    $region51: #{tpu_custom_call.1} parent=1 // pred_check_branch
      %202 = sbr.rel (0) target = $region53
    $region52: #{tpu_custom_call.1} parent=1 // pred_region
      %204 = dma.done [#allocation4], 128
    $region53: #{tpu_custom_call.1} parent=1 // pred_fallthru
      _
    %205 = vsyncpa [#allocation3], 1
    %206 = vsyncpa [#allocation6], 1
    %207 = vsyncpa [#allocation9], 1
    %208 = vsyncpa [#allocation4], 1

</llo_original>
